<compile_context>
chip_gen: v7x
topology: tpu7x:2x2x1
jax: 0.10.0
libtpu: 0.0.40
codegen_flags: <defaults>
</compile_context>

<pallas_src>
import jax
import jax.numpy as jnp
from jax.experimental import pallas as pl
from jax.experimental.pallas import tpu as pltpu


def mixing_kernel(x_ref, w_ref, b_ref, o_ref):
    # x_ref: (bb, T, dd) VMEM input tile  (dd is a multiple of 128 -> lane dense)
    # w_ref: (T,)  SMEM  -- fnn_t weight, read as scalars
    # b_ref: (1,)  SMEM  -- fnn_t bias
    # o_ref: (bb, T, dd) VMEM output tile
    T = x_ref.shape[1]

    # Unrolled T-step multiply-accumulate in f32 (time_len is small).  Each step
    # is a fresh read of one time-slice of x_ref, so no full-tile f32 temporary
    # stays live, and the reduction runs on VALU adds instead of an XLU
    # cross-sublane reduce.
    acc = x_ref[:, 0, :].astype(jnp.float32) * w_ref[0]
    for t in range(1, T):
        acc = acc + x_ref[:, t, :].astype(jnp.float32) * w_ref[t]

    y = jnp.maximum(acc + b_ref[0], 0.0)                      # (bb, dd) f32
    # TODO(synk): nn.Dropout(p=0.1) is identity at inference; training-mode
    # stochastic dropout (pltpu.prng_*) is not implemented here.

    # Broadcast residual add in the native dtype: second read of x_ref, y is
    # cast once.  For bf16 inputs this keeps the whole epilogue on bf16 VALU.
    o_ref[...] = x_ref[...] + y[:, None, :].astype(o_ref.dtype)


def _largest_divisor_leq(n, cap):
    cap = max(1, min(n, cap))
    for d in range(cap, 0, -1):
        if n % d == 0:
            return d
    return 1


def _tpu_defaults():
    """(target block bytes, scoped-VMEM limit bytes) per TPU generation."""
    kind = ""
    try:
        kind = jax.devices()[0].device_kind.lower()
    except Exception:
        pass
    if "v7" in kind:
        # v7x: 64 MiB VMEM per TensorCore -- keep the whole pipeline footprint
        # (2x in + 2x out buffers + temps) well under ~48 MiB.
        return 4 << 20, 48 << 20
    if "v6" in kind:
        # v6e: 128 MiB physical VMEM; bigger blocks amortize the ~0.35us per
        # grid-step overhead and keep dd == D (contiguous per-row DMA).
        return 5 << 20, 64 << 20
    if "v5" in kind:
        # v5e: ~2 MiB blocks are the sweet spot, but set the limit explicitly
        # (default scoped limit is only 16 MiB) so 4 buffers + temps always fit.
        return 2 << 20, 32 << 20
    return 2 << 20, 32 << 20


def _choose_tiles(B, T, Dp, itemsize, target_bytes):
    """Pick (bb, dd): lane-dense blocks ~target_bytes with >= a few grid steps."""
    n_lanes = Dp // 128
    lane_bytes = T * 128 * itemsize
    g = _largest_divisor_leq(n_lanes, max(1, target_bytes // lane_bytes))
    dd = 128 * g
    bb = _largest_divisor_leq(B, max(1, target_bytes // (T * dd * itemsize)))

    # Guarantee at least a few grid steps so the BlockSpec pipeline can
    # double-buffer (DMA/compute overlap) and v7x megacore splits the work.
    min_steps = min(4, B * n_lanes)
    while (B // bb) * (n_lanes // g) < min_steps:
        if bb > 1:
            bb = _largest_divisor_leq(B, bb - 1)
        elif g > 1:
            g = _largest_divisor_leq(n_lanes, g - 1)
            dd = 128 * g
        else:
            break
    return bb, dd


def mixing_forward(x, w, b):
    # x: (B, T, D); w: (1, T) = nn.Linear(time_len, 1).weight; b: (1,) = bias
    B, T, D = x.shape
    target_bytes, vmem_limit = _tpu_defaults()

    # Lane-dense output blocks are the biggest single lever: pad D up to a
    # multiple of 128 (and slice the result) instead of emitting masked stores.
    Dp = ((D + 127) // 128) * 128
    xp = x if Dp == D else jnp.pad(x, ((0, 0), (0, 0), (0, Dp - D)))

    w_s = w.reshape(T).astype(jnp.float32)   # SMEM scalars (reduction stays f32)
    b_s = b.reshape(1).astype(jnp.float32)

    bb, dd = _choose_tiles(B, T, Dp, xp.dtype.itemsize, target_bytes)
    grid = (B // bb, Dp // dd)

    out = pl.pallas_call(
        mixing_kernel,
        out_shape=jax.ShapeDtypeStruct((B, T, Dp), x.dtype),
        grid_spec=pltpu.PrefetchScalarGridSpec(
            num_scalar_prefetch=0,
            grid=grid,
            in_specs=[
                pl.BlockSpec((bb, T, dd), lambda bi, di: (bi, 0, di)),   # x tile
                pl.BlockSpec(memory_space=pltpu.MemorySpace.SMEM),       # weight (T,)
                pl.BlockSpec(memory_space=pltpu.MemorySpace.SMEM),       # bias (1,)
            ],
            out_specs=pl.BlockSpec((bb, T, dd), lambda bi, di: (bi, 0, di)),
        ),
        compiler_params=pltpu.CompilerParams(
            dimension_semantics=("parallel", "parallel"),
            vmem_limit_bytes=vmem_limit,
        ),
    )(xp, w_s, b_s)

    return out if Dp == D else out[:, :, :D]


def reference_forward(x, w, b):
    # Pure-JAX reference mirroring the PyTorch eval-mode path; explicit f32
    # reduce (no MXU) so the comparison is not polluted by matmul precision.
    x32 = x.astype(jnp.float32)
    w32 = w[0].astype(jnp.float32)
    y = jnp.sum(x32 * w32[None, :, None], axis=1) + b[0].astype(jnp.float32)
    y = jnp.maximum(y, 0.0)
    return (x32 + y[:, None, :]).astype(x.dtype)


if __name__ == "__main__":
    key = jax.random.PRNGKey(0)
    kx, kw, kb = jax.random.split(key, 3)

    B, T, D = 2, 8, 128  # batch, time_len, input_dim (lane-dense case)
    x = jax.random.normal(kx, (B, T, D), dtype=jnp.float32)

    # Parameter init matching nn.Linear(time_len, 1) shapes:
    #   weight: (1, time_len), bias: (1,)  -- uniform(-1/sqrt(T), 1/sqrt(T))
    bound = 1.0 / jnp.sqrt(jnp.float32(T))
    w = jax.random.uniform(kw, (1, T), dtype=jnp.float32, minval=-bound, maxval=bound)
    b = jax.random.uniform(kb, (1,), dtype=jnp.float32, minval=-bound, maxval=bound)

    out = jax.block_until_ready(mixing_forward(x, w, b))
    ref = reference_forward(x, w, b)
    assert out.shape == (B, T, D)
    assert jnp.allclose(out, ref, atol=1e-5, rtol=1e-5)

    # Non-multiple-of-128 feature dim exercises the pad-and-slice path.
    D2 = 96
    x2 = jax.random.normal(kb, (B, T, D2), dtype=jnp.float32)
    out2 = jax.block_until_ready(mixing_forward(x2, w, b))
    ref2 = reference_forward(x2, w, b)
    assert out2.shape == (B, T, D2)
    assert jnp.allclose(out2, ref2, atol=1e-5, rtol=1e-5)

    print("KERNEL_OK")
</pallas_src>

<mosaic_0001>
module attributes {stable_mosaic.version = 11 : i64} {
  func.func @mixing_kernel(%arg0: i32, %arg1: i32, %arg2: memref<1x8x128xf32, #tpu.memory_space<vmem>>, %arg3: memref<8xf32, #tpu.memory_space<smem>>, %arg4: memref<1xf32, #tpu.memory_space<smem>>, %arg5: memref<1x8x128xf32, #tpu.memory_space<vmem>>) attributes {dimension_semantics = [#tpu.dimension_semantics<parallel>, #tpu.dimension_semantics<parallel>], iteration_bounds = array<i64: 2, 1>, scalar_prefetch = 0 : i64, scratch_operands = 0 : i64, tpu.core_type = #tpu.core_type<tc>, window_params = [{transform_indices = @transform_0, window_bounds = array<i64: 1, 8, 128>}, {transform_indices = @transform_1, window_bounds = array<i64: 8>}, {transform_indices = @transform_2, window_bounds = array<i64: 1>}, {transform_indices = @transform_3, window_bounds = array<i64: 1, 8, 128>}]} {
    %c0 = arith.constant 0 : index
    %c0_0 = arith.constant 0 : index
    %c0_1 = arith.constant 0 : index
    %0 = vector.load %arg2[%c0, %c0_0, %c0_1] : memref<1x8x128xf32, #tpu.memory_space<vmem>>, vector<1x1x128xf32>
    %1 = vector.shape_cast %0 : vector<1x1x128xf32> to vector<1x128xf32>
    %c0_2 = arith.constant 0 : index
    %2 = memref.load %arg3[%c0_2] : memref<8xf32, #tpu.memory_space<smem>>
    %3 = vector.broadcast %2 : f32 to vector<1x128xf32>
    %4 = arith.mulf %1, %3 : vector<1x128xf32>
    %c0_3 = arith.constant 0 : index
    %c1 = arith.constant 1 : index
    %c0_4 = arith.constant 0 : index
    %5 = vector.load %arg2[%c0_3, %c1, %c0_4] : memref<1x8x128xf32, #tpu.memory_space<vmem>>, vector<1x1x128xf32>
    %6 = vector.shape_cast %5 : vector<1x1x128xf32> to vector<1x128xf32>
    %c1_5 = arith.constant 1 : index
    %7 = memref.load %arg3[%c1_5] : memref<8xf32, #tpu.memory_space<smem>>
    %8 = vector.broadcast %7 : f32 to vector<1x128xf32>
    %9 = arith.mulf %6, %8 : vector<1x128xf32>
    %10 = arith.addf %4, %9 : vector<1x128xf32>
    %c0_6 = arith.constant 0 : index
    %c2 = arith.constant 2 : index
    %c0_7 = arith.constant 0 : index
    %11 = vector.load %arg2[%c0_6, %c2, %c0_7] : memref<1x8x128xf32, #tpu.memory_space<vmem>>, vector<1x1x128xf32>
    %12 = vector.shape_cast %11 : vector<1x1x128xf32> to vector<1x128xf32>
    %c2_8 = arith.constant 2 : index
    %13 = memref.load %arg3[%c2_8] : memref<8xf32, #tpu.memory_space<smem>>
    %14 = vector.broadcast %13 : f32 to vector<1x128xf32>
    %15 = arith.mulf %12, %14 : vector<1x128xf32>
    %16 = arith.addf %10, %15 : vector<1x128xf32>
    %c0_9 = arith.constant 0 : index
    %c3 = arith.constant 3 : index
    %c0_10 = arith.constant 0 : index
    %17 = vector.load %arg2[%c0_9, %c3, %c0_10] : memref<1x8x128xf32, #tpu.memory_space<vmem>>, vector<1x1x128xf32>
    %18 = vector.shape_cast %17 : vector<1x1x128xf32> to vector<1x128xf32>
    %c3_11 = arith.constant 3 : index
    %19 = memref.load %arg3[%c3_11] : memref<8xf32, #tpu.memory_space<smem>>
    %20 = vector.broadcast %19 : f32 to vector<1x128xf32>
    %21 = arith.mulf %18, %20 : vector<1x128xf32>
    %22 = arith.addf %16, %21 : vector<1x128xf32>
    %c0_12 = arith.constant 0 : index
    %c4 = arith.constant 4 : index
    %c0_13 = arith.constant 0 : index
    %23 = vector.load %arg2[%c0_12, %c4, %c0_13] : memref<1x8x128xf32, #tpu.memory_space<vmem>>, vector<1x1x128xf32>
    %24 = vector.shape_cast %23 : vector<1x1x128xf32> to vector<1x128xf32>
    %c4_14 = arith.constant 4 : index
    %25 = memref.load %arg3[%c4_14] : memref<8xf32, #tpu.memory_space<smem>>
    %26 = vector.broadcast %25 : f32 to vector<1x128xf32>
    %27 = arith.mulf %24, %26 : vector<1x128xf32>
    %28 = arith.addf %22, %27 : vector<1x128xf32>
    %c0_15 = arith.constant 0 : index
    %c5 = arith.constant 5 : index
    %c0_16 = arith.constant 0 : index
    %29 = vector.load %arg2[%c0_15, %c5, %c0_16] : memref<1x8x128xf32, #tpu.memory_space<vmem>>, vector<1x1x128xf32>
    %30 = vector.shape_cast %29 : vector<1x1x128xf32> to vector<1x128xf32>
    %c5_17 = arith.constant 5 : index
    %31 = memref.load %arg3[%c5_17] : memref<8xf32, #tpu.memory_space<smem>>
    %32 = vector.broadcast %31 : f32 to vector<1x128xf32>
    %33 = arith.mulf %30, %32 : vector<1x128xf32>
    %34 = arith.addf %28, %33 : vector<1x128xf32>
    %c0_18 = arith.constant 0 : index
    %c6 = arith.constant 6 : index
    %c0_19 = arith.constant 0 : index
    %35 = vector.load %arg2[%c0_18, %c6, %c0_19] : memref<1x8x128xf32, #tpu.memory_space<vmem>>, vector<1x1x128xf32>
    %36 = vector.shape_cast %35 : vector<1x1x128xf32> to vector<1x128xf32>
    %c6_20 = arith.constant 6 : index
    %37 = memref.load %arg3[%c6_20] : memref<8xf32, #tpu.memory_space<smem>>
    %38 = vector.broadcast %37 : f32 to vector<1x128xf32>
    %39 = arith.mulf %36, %38 : vector<1x128xf32>
    %40 = arith.addf %34, %39 : vector<1x128xf32>
    %c0_21 = arith.constant 0 : index
    %c7 = arith.constant 7 : index
    %c0_22 = arith.constant 0 : index
    %41 = vector.load %arg2[%c0_21, %c7, %c0_22] : memref<1x8x128xf32, #tpu.memory_space<vmem>>, vector<1x1x128xf32>
    %42 = vector.shape_cast %41 : vector<1x1x128xf32> to vector<1x128xf32>
    %c7_23 = arith.constant 7 : index
    %43 = memref.load %arg3[%c7_23] : memref<8xf32, #tpu.memory_space<smem>>
    %44 = vector.broadcast %43 : f32 to vector<1x128xf32>
    %45 = arith.mulf %42, %44 : vector<1x128xf32>
    %46 = arith.addf %40, %45 : vector<1x128xf32>
    %c0_24 = arith.constant 0 : index
    %47 = memref.load %arg4[%c0_24] : memref<1xf32, #tpu.memory_space<smem>>
    %48 = vector.broadcast %47 : f32 to vector<1x128xf32>
    %49 = arith.addf %46, %48 : vector<1x128xf32>
    %cst = arith.constant 0.000000e+00 : f32
    %50 = vector.broadcast %cst : f32 to vector<1x128xf32>
    %51 = arith.maximumf %49, %50 : vector<1x128xf32>
    %c0_25 = arith.constant 0 : index
    %c0_26 = arith.constant 0 : index
    %c0_27 = arith.constant 0 : index
    %52 = vector.load %arg2[%c0_25, %c0_26, %c0_27] : memref<1x8x128xf32, #tpu.memory_space<vmem>>, vector<1x8x128xf32>
    %53 = vector.shape_cast %51 : vector<1x128xf32> to vector<1x1x128xf32>
    %54 = vector.broadcast %53 : vector<1x1x128xf32> to vector<1x8x128xf32>
    %55 = arith.addf %52, %54 : vector<1x8x128xf32>
    %c0_28 = arith.constant 0 : index
    %c0_29 = arith.constant 0 : index
    %c0_30 = arith.constant 0 : index
    %56 = vector.load %arg5[%c0_28, %c0_29, %c0_30] : memref<1x8x128xf32, #tpu.memory_space<vmem>>, vector<1x8x128xf32>
    tpu.vector_store %arg5[%c0_28, %c0_29, %c0_30], %55 {strides = array<i32>} : memref<1x8x128xf32, #tpu.memory_space<vmem>>, vector<1x8x128xf32>,
    return
  }
  func.func @transform_0(%arg0: i32, %arg1: i32) -> (i32, i32, i32) {
    %c0_i32 = arith.constant 0 : i32
    %c0_i32_0 = arith.constant 0 : i32
    return %arg0, %c0_i32, %arg1 : i32, i32, i32
  }
  func.func @transform_1(%arg0: i32, %arg1: i32) -> i32 {
    %c0_i32 = arith.constant 0 : i32
    %c0_i32_0 = arith.constant 0 : i32
    return %c0_i32 : i32
  }
  func.func @transform_2(%arg0: i32, %arg1: i32) -> i32 {
    %c0_i32 = arith.constant 0 : i32
    %c0_i32_0 = arith.constant 0 : i32
    return %c0_i32 : i32
  }
  func.func @transform_3(%arg0: i32, %arg1: i32) -> (i32, i32, i32) {
    %c0_i32 = arith.constant 0 : i32
    %c0_i32_0 = arith.constant 0 : i32
    return %arg0, %c0_i32, %arg1 : i32, i32, i32
  }
}

</mosaic_0001>

<llo_original>
// kernel: tpu_custom_call.1
$region0: #{tpu_custom_call.1}
  #allocation0 [shape = 'u32[]', space=smem, size = 0x4, offset = 0x4, fixed_abs, tag = 'smem constant byte address 0x4 - core index']
  #allocation1 [shape = 'u32[144,128]{1,0:T(1,128)}', space=vmem, size = 0x12000, scoped, tag = 'internal scratch']
  #allocation2 [shape = 'f32[1]{0:T(128)S(6)}', space=smem, size = 0x200, scoped, tag = 'scoped memory for tpu_custom_call.1']
  %s0 = inlined_call_operand.hbm [shape: f32[2,8,128], index: 0, kind: input, shape index: {}]
  %s1 = inlined_call_operand.vmem [shape: f32[8], index: 1, kind: input, shape index: {}]
  %s2 = inlined_call_operand.<no memory space> [shape: f32[1], index: 2, kind: input, shape index: {}]
  %s3 = inlined_call_operand.hbm [shape: f32[2,8,128], index: 3, kind: output, shape index: {}]
  %s4 = sld [smem:[#allocation0]]
  $region53: #{tpu_custom_call.1} parent=0
    _
  %s6 = ssub.s32 1, %s4
  %s7 = scalar_select 0, %s6, %s4
  %8 = sst [smem:[#allocation2]] %s2
  $region1: #{tpu_custom_call.1} parent=0
    #allocation3 [shape = 'u8[8192]{0}', space=vmem, size = 0x2000, scoped, tag = 'input window, operand 0']
    #allocation4 [shape = 's32[2]{0}', space=sflag, size = 0x8, scoped, tag = 'scoped memory for tpu_custom_call.1']
    #allocation5 [shape = 's32[2]{0}', space=sflag, size = 0x8, scoped, tag = 'scoped memory for tpu_custom_call.1']
    #allocation6 [shape = 's32[2]{0}', space=sflag, size = 0x8, scoped, tag = 'scoped memory for tpu_custom_call.1']
    #allocation7 [shape = 'u8[512]{0}', space=smem, size = 0x200, scoped, tag = 'input window, operand 1, single buffered']
    #allocation8 [shape = 'u8[8192]{0}', space=vmem, size = 0x2000, scoped, tag = 'output window, operand 0']
    %9 = vsyncpa [#allocation4], 0
    %s10 = scalar_lea.sflag [#allocation4], 1
    %11 = vsyncpa %s10, 0
    %12 = vsyncpa [#allocation6], 0
    %13 = vsyncpa [#allocation5], 0
    %s14 = scalar_lea.sflag [#allocation5], 1
    %15 = vsyncpa %s14, 0
    loop: start=0, step=1, limit=4
    $region2: #{tpu_custom_call.1} parent=1 // loop_pre_header
      _
    $region3: #{tpu_custom_call.1} parent=1 // loop_header
      %s17 = sphi 0, %s21
      %p18 = scmp.ge.s32.totalorder %s17, 4
      %s24 = sphi 0, %s36
      %s25 = sphi 0, %s32
      %s26 = sphi 0, %s24
      %s27 = sphi 0, %s25
      %s28 = sphi 0, %s26
      %s29 = sphi 0, %s27
      %s41 = sphi 0, %s43
      %s44 = sphi 0, %s41
      %s45 = sphi 0, %s44
      %s61 = sphi 0, %s45
      %s65 = sphi 0, %s65
      %s67 = sphi 0, %s65
      %s68 = sphi 0, %s67
      %s82 = sphi 0, %s68
      %s86 = sphi 0, %s86
      %s88 = sphi 0, %s86
      %s89 = sphi 0, %s88
      %s103 = sphi 0, %s89
      %s111 = sphi 0, %s113
      %s114 = sphi 0, %s111
      %s115 = sphi 0, %s114
      %s131 = sphi 0, %s115
    $region4: #{tpu_custom_call.1} parent=1 // loop_header_branch
      %20 = sbr.rel (%p18) target = $region8
    $region5: #{tpu_custom_call.1} parent=1 // loop_body
      %s22 = ssub.s32 %s17, 1
      %s23 = ssub.s32 %s17, 2
      %s30 = sadd.s32 1, %s25
      %p31 = scmp.ge.s32.totalorder %s30, 1
      %s32 = scalar_select %p31, 0, %s30
      %s33 = sadd.s32 1, %s24
      %s34 = scalar_select %p31, %s33, %s24
      %p35 = scmp.ge.s32.totalorder %s34, 2
      %s36 = scalar_select %p35, 0, %s34
      %s37 = ssub.s32 %s24, %s36
      %s38 = ssub.s32 %s25, %s32
      %s39 = sor.u32 %s37, %s38
      %p40 = scmp.eq.s32.totalorder %s39, 0
      %s42 = sadd.s32 %s41, 1
      %s43 = scalar_select %p40, %s41, %s42
      %p46 = pneg %p40
      %p47 = scmp.eq.s32.totalorder %s17, 1
      %p48 = por %p46, %p47
      %p49 = scmp.ne.s32.totalorder %s41, %s44
      %p50 = scmp.eq.s32.totalorder %s17, 0
      %p51 = por %p49, %p50
      %p52 = scmp.ne.s32.totalorder %s41, %s44
      %p53 = scmp.eq.s32.totalorder %s22, 1
      %p54 = por %p52, %p53
      %p55 = scmp.ne.s32.totalorder %s44, %s45
      %p56 = scmp.eq.s32.totalorder %s22, 0
      %p57 = por %p55, %p56
      %p58 = scmp.ne.s32.totalorder %s44, %s45
      %p59 = scmp.eq.s32.totalorder %s23, 1
      %p60 = por %p58, %p59
      %p62 = scmp.ne.s32.totalorder %s45, %s61
      %p63 = scmp.eq.s32.totalorder %s23, 0
      %p64 = por %p62, %p63
      %s66 = sadd.s32 %s65, 1
      %p69 = scmp.eq.s32.totalorder %s17, 1
      %p70 = scmp.ne.s32.totalorder %s65, %s67
      %p71 = scmp.eq.s32.totalorder %s17, 0
      %p72 = por %p70, %p71
      %p73 = scmp.ne.s32.totalorder %s65, %s67
      %p74 = scmp.eq.s32.totalorder %s22, 1
      %p75 = por %p73, %p74
      %p76 = scmp.ne.s32.totalorder %s67, %s68
      %p77 = scmp.eq.s32.totalorder %s22, 0
      %p78 = por %p76, %p77
      %p79 = scmp.ne.s32.totalorder %s67, %s68
      %p80 = scmp.eq.s32.totalorder %s23, 1
      %p81 = por %p79, %p80
      %p83 = scmp.ne.s32.totalorder %s68, %s82
      %p84 = scmp.eq.s32.totalorder %s23, 0
      %p85 = por %p83, %p84
      %s87 = sadd.s32 %s86, 1
      %p90 = scmp.eq.s32.totalorder %s17, 1
      %p91 = scmp.ne.s32.totalorder %s86, %s88
      %p92 = scmp.eq.s32.totalorder %s17, 0
      %p93 = por %p91, %p92
      %p94 = scmp.ne.s32.totalorder %s86, %s88
      %p95 = scmp.eq.s32.totalorder %s22, 1
      %p96 = por %p94, %p95
      %p97 = scmp.ne.s32.totalorder %s88, %s89
      %p98 = scmp.eq.s32.totalorder %s22, 0
      %p99 = por %p97, %p98
      %p100 = scmp.ne.s32.totalorder %s88, %s89
      %p101 = scmp.eq.s32.totalorder %s23, 1
      %p102 = por %p100, %p101
      %p104 = scmp.ne.s32.totalorder %s89, %s103
      %p105 = scmp.eq.s32.totalorder %s23, 0
      %p106 = por %p104, %p105
      %s107 = ssub.s32 %s24, %s36
      %s108 = ssub.s32 %s25, %s32
      %s109 = sor.u32 %s107, %s108
      %p110 = scmp.eq.s32.totalorder %s109, 0
      %s112 = sadd.s32 %s111, 1
      %s113 = scalar_select %p110, %s111, %s112
      %p116 = pneg %p110
      %p117 = scmp.eq.s32.totalorder %s17, 1
      %p118 = por %p116, %p117
      %p119 = scmp.ne.s32.totalorder %s111, %s114
      %p120 = scmp.eq.s32.totalorder %s17, 0
      %p121 = por %p119, %p120
      %p122 = scmp.ne.s32.totalorder %s111, %s114
      %p123 = scmp.eq.s32.totalorder %s22, 1
      %p124 = por %p122, %p123
      %p125 = scmp.ne.s32.totalorder %s114, %s115
      %p126 = scmp.eq.s32.totalorder %s22, 0
      %p127 = por %p125, %p126
      %p128 = scmp.ne.s32.totalorder %s114, %s115
      %p129 = scmp.eq.s32.totalorder %s23, 1
      %p130 = por %p128, %p129
      %p132 = scmp.ne.s32.totalorder %s115, %s131
      %p133 = scmp.eq.s32.totalorder %s23, 0
      %p134 = por %p132, %p133
      %p135 = scmp.le.s32.totalorder 1, %s17
      %p136 = scmp.lt.s32.totalorder %s17, 3
      %p137 = pnand %p135, %p136
      %p138 = pneg %p137
      // Predicated region
      $region9: #{tpu_custom_call.1} parent=5 // pred_check
        _
      $region10: #{tpu_custom_call.1} parent=5 // pred_check_branch
        %140 = sbr.rel (%p137) target = $region12
      $region11: #{tpu_custom_call.1} parent=5 // pred_region
        %s141 = ssub.s32 %s17, 1
        // Predicated region
        $region13: #{tpu_custom_call.1} parent=11 // pred_check
          %p142 = pneg %p78
        $region14: #{tpu_custom_call.1} parent=11 // pred_check_branch
          %144 = sbr.rel (%p142) target = $region16
        $region15: #{tpu_custom_call.1} parent=11 // pred_region
          %s146 = ssub.s32 16, 16
          %147 = vsyncadd [#allocation6], %s146
          %s149 = sshll.u32 %s1, 4
          %s150 = int_to_ptr.vmem [resolvable:$true] %s149
          %152 = dma.vmem_to_smem %s150, 16, [#allocation7], [#allocation6]
        $region16: #{tpu_custom_call.1} parent=11 // pred_fallthru
          _
        // Predicated region
        $region17: #{tpu_custom_call.1} parent=11 // pred_check
          %p153 = pneg %p99
        $region18: #{tpu_custom_call.1} parent=11 // pred_check_branch
          %155 = sbr.rel (%p153) target = $region20
        $region19: #{tpu_custom_call.1} parent=11 // pred_region
          _
        $region20: #{tpu_custom_call.1} parent=11 // pred_fallthru
          _
      $region12: #{tpu_custom_call.1} parent=5 // pred_fallthru
        _
      %p156 = scmp.lt.s32.totalorder %s17, 2
      // Predicated region
      $region21: #{tpu_custom_call.1} parent=5 // pred_check
        %p157 = pneg %p156
      $region22: #{tpu_custom_call.1} parent=5 // pred_check_branch
        %159 = sbr.rel (%p157) target = $region24
      $region23: #{tpu_custom_call.1} parent=5 // pred_region
        // Predicated region
        $region25: #{tpu_custom_call.1} parent=23 // pred_check
          %p160 = pneg %p51
        $region26: #{tpu_custom_call.1} parent=23 // pred_check_branch
          %162 = sbr.rel (%p160) target = $region28
        $region27: #{tpu_custom_call.1} parent=23 // pred_region
          %s163 = sand.u32 %s41, 1
          %s164 = scalar_lea.sflag [#allocation4], %s163
          %s165 = sand.u32 %s41, 1
          %s166 = smul.addr %s165, 8
          %s167 = scalar_lea.vmem [#allocation3], %s166
          %s169 = ssub.s32 128, 128
          %170 = vsyncadd %s164, %s169
          %s171 = sadd.s32 %s25, %s24
          %s172 = smul.addr %s171, 128
          %s173 = scalar_lea.hbm %s0, %s172
          %s175 = sshll.u32 %s167, 4
          %s176 = int_to_ptr.vmem [resolvable:$true] %s175
          %178 = dma.hbm_to_vmem [thread:$0]  %s173, 128, %s176, %s164
        $region28: #{tpu_custom_call.1} parent=23 // pred_fallthru
          _
      $region24: #{tpu_custom_call.1} parent=5 // pred_fallthru
        _
      %p179 = scmp.le.s32.totalorder 1, %s17
      %p180 = scmp.lt.s32.totalorder %s17, 3
      %p181 = pnand %p179, %p180
      %p182 = pneg %p181
      // Predicated region
      $region29: #{tpu_custom_call.1} parent=5 // pred_check
        _
      $region30: #{tpu_custom_call.1} parent=5 // pred_check_branch
        %184 = sbr.rel (%p181) target = $region32
      $region31: #{tpu_custom_call.1} parent=5 // pred_region
        %s185 = ssub.s32 %s17, 1
        %s186 = sand.u32 %s44, 1
        %s187 = scalar_lea.sflag [#allocation4], %s186
        %s188 = sand.u32 %s44, 1
        %s189 = smul.addr %s188, 8
        %s190 = scalar_lea.vmem [#allocation3], %s189
        // Predicated region
        $region33: #{tpu_custom_call.1} parent=31 // pred_check
          %p191 = pneg %p57
        $region34: #{tpu_custom_call.1} parent=31 // pred_check_branch
          %193 = sbr.rel (%p191) target = $region36
        $region35: #{tpu_custom_call.1} parent=31 // pred_region
          %194 = dma.done %s187, 128
        $region36: #{tpu_custom_call.1} parent=31 // pred_fallthru
          _
        // Predicated region
        $region37: #{tpu_custom_call.1} parent=31 // pred_check
          %p195 = pneg %p78
        $region38: #{tpu_custom_call.1} parent=31 // pred_check_branch
          %197 = sbr.rel (%p195) target = $region40
        $region39: #{tpu_custom_call.1} parent=31 // pred_region
          %198 = dma.done [#allocation6], 16
        $region40: #{tpu_custom_call.1} parent=31 // pred_fallthru
          _
        %199 = sfence
        %s200 = sand.u32 %s44, 1
        %s201 = scalar_lea.sflag [#allocation4], %s200
        %s202 = sand.u32 %s44, 1
        %s203 = smul.addr %s202, 8
        %s204 = scalar_lea.vmem [#allocation3], %s203
        %p205 = pneg %p57
        %p206 = pneg %p54
        %p207 = pneg %p78
        %p208 = pneg %p75
        %p209 = pneg %p99
        %p210 = pneg %p96
        %p211 = pneg %p127
        %p212 = pneg %p124
        %s213 = sand.u32 %s114, 1
        %s214 = scalar_lea.sflag [#allocation5], %s213
        %s215 = sand.u32 %s114, 1
        %s216 = smul.addr %s215, 8
        %s217 = scalar_lea.vmem [#allocation8], %s216
        %v218 = vld [vmem:[%s190] sm:$0x1]
        %s219 = sld [smem:[#allocation7]]
        %v220 = vstv %s219
        %v221 = vmul.f32 %v218, %v220
        %v222 = vld [vmem:[%s190 + $0x1] sm:$0x1]
        %s223 = sld [smem:[#allocation7 + $0x1]]
        %v224 = vstv %s223
        %v225 = vmul.f32 %v222, %v224
        %v226 = vadd.f32 %v221, %v225
        %v227 = vld [vmem:[%s190 + $0x2] sm:$0x1]
        %s228 = sld [smem:[#allocation7 + $0x2]]
        %v229 = vstv %s228
        %v230 = vmul.f32 %v227, %v229
        %v231 = vadd.f32 %v226, %v230
        %v232 = vld [vmem:[%s190 + $0x3] sm:$0x1]
        %s233 = sld [smem:[#allocation7 + $0x3]]
        %v234 = vstv %s233
        %v235 = vmul.f32 %v232, %v234
        %v236 = vadd.f32 %v231, %v235
        %v237 = vld [vmem:[%s190 + $0x4] sm:$0x1]
        %s238 = sld [smem:[#allocation7 + $0x4]]
        %v239 = vstv %s238
        %v240 = vmul.f32 %v237, %v239
        %v241 = vadd.f32 %v236, %v240
        %v242 = vld [vmem:[%s190 + $0x5] sm:$0x1]
        %s243 = sld [smem:[#allocation7 + $0x5]]
        %v244 = vstv %s243
        %v245 = vmul.f32 %v242, %v244
        %v246 = vadd.f32 %v241, %v245
        %v247 = vld [vmem:[%s190 + $0x6] sm:$0x1]
        %s248 = sld [smem:[#allocation7 + $0x6]]
        %v249 = vstv %s248
        %v250 = vmul.f32 %v247, %v249
        %v251 = vadd.f32 %v246, %v250
        %v252 = vld [vmem:[%s190 + $0x7] sm:$0x1]
        %s253 = sld [smem:[#allocation7 + $0x7]]
        %v254 = vstv %s253
        %v255 = vmul.f32 %v252, %v254
        %v256 = vadd.f32 %v251, %v255
        %s257 = sld [smem:[#allocation2]]
        %v258 = vstv %s257
        %v259 = vadd.f32 %v256, %v258
        %v260 = vmax.f32 %v259, 0.0
        %v261 = vld [vmem:[%s190] sm:$0xff]
        %v262 = vlaneseq
        %v263 = vshrl.u32 %v262, 7
        %v264 = vsub.s32 0, %v263
        %v265 = vrot.slane %v260, %v264
        %v266 = vadd.f32 %v261, %v265
        %267 = vst [vmem:[%s217] sm:$0xff] %v266
        %s268 = sand.u32 %s114, 1
        %s269 = scalar_lea.sflag [#allocation5], %s268
        %s270 = sand.u32 %s114, 1
        %s271 = smul.addr %s270, 8
        %s272 = scalar_lea.vmem [#allocation8], %s271
        // Predicated region
        $region41: #{tpu_custom_call.1} parent=31 // pred_check
          %p273 = pneg %p124
        $region42: #{tpu_custom_call.1} parent=31 // pred_check_branch
          %275 = sbr.rel (%p273) target = $region44
        $region43: #{tpu_custom_call.1} parent=31 // pred_region
          %s277 = ssub.s32 128, 128
          %278 = vsyncadd %s269, %s277
          %s279 = sadd.s32 %s27, %s26
          %s280 = smul.addr %s279, 128
          %s281 = scalar_lea.hbm %s3, %s280
          %s283 = sshll.u32 %s272, 4
          %s284 = int_to_ptr.vmem [resolvable:$true] %s283
          %286 = dma.vmem_to_hbm [thread:$0]  %s284, 128, %s281, %s269
        $region44: #{tpu_custom_call.1} parent=31 // pred_fallthru
          _
      $region32: #{tpu_custom_call.1} parent=5 // pred_fallthru
        _
      %p287 = scmp.le.s32.totalorder 2, %s17
      // Predicated region
      $region45: #{tpu_custom_call.1} parent=5 // pred_check
        %p288 = pneg %p287
      $region46: #{tpu_custom_call.1} parent=5 // pred_check_branch
        %290 = sbr.rel (%p288) target = $region48
      $region47: #{tpu_custom_call.1} parent=5 // pred_region
        %s291 = ssub.s32 %s17, 2
        // Predicated region
        $region49: #{tpu_custom_call.1} parent=47 // pred_check
          %p292 = pneg %p130
        $region50: #{tpu_custom_call.1} parent=47 // pred_check_branch
          %294 = sbr.rel (%p292) target = $region52
        $region51: #{tpu_custom_call.1} parent=47 // pred_region
          %s295 = sand.u32 %s115, 1
          %s296 = scalar_lea.sflag [#allocation5], %s295
          %s297 = sand.u32 %s115, 1
          %s298 = smul.addr %s297, 8
          %s299 = scalar_lea.vmem [#allocation8], %s298
          %300 = dma.done %s296, 128
        $region52: #{tpu_custom_call.1} parent=47 // pred_fallthru
          _
      $region48: #{tpu_custom_call.1} parent=5 // pred_fallthru
        _
    $region6: #{tpu_custom_call.1} parent=1 // loop_footer
      %s21 = sadd.s32 1, %s17
    $region7: #{tpu_custom_call.1} parent=1 // loop_footer_branch
      %16 = sbr.rel target = $region3
    $region8: #{tpu_custom_call.1} parent=1 // loop_exit
      _
    %301 = vsyncpa [#allocation4], 1
    %s302 = scalar_lea.sflag [#allocation4], 1
    %303 = vsyncpa %s302, 1
    %304 = vsyncpa [#allocation5], 1
    %s305 = scalar_lea.sflag [#allocation5], 1
    %306 = vsyncpa %s305, 1
    %307 = vsyncpa [#allocation6], 1
    %s308 = scalar_lea.sflag [#allocation6], 1
    %309 = vsyncpa %s308, 1

</llo_original>
